<compile_context>
chip_gen: v7x
topology: tpu7x:2x2x1
jax: 0.10.0
libtpu: 0.0.40
codegen_flags: <defaults>
</compile_context>

<pallas_src>
import functools

import jax
import jax.numpy as jnp
from jax.experimental import pallas as pl
from jax.experimental.pallas import tpu as pltpu


def _round_up(x, m):
    return ((x + m - 1) // m) * m


# ----------------------------------------------------------------------------
# Kernel
# ----------------------------------------------------------------------------
def _fc_kernel(x_ref, w_ref, *rest, activation, use_bias, num_k):
    # refs: x (tm, tk), w (tk, tn) [already transposed], optional bias (1, tn),
    #       out (tm, tn) f32 (doubles as the accumulator when num_k > 1).
    if use_bias:
        b_ref, o_ref = rest
    else:
        (o_ref,) = rest

    def epilogue(acc):
        out = acc
        if use_bias:
            out = out + b_ref[...].astype(jnp.float32)     # (1, tn) broadcast
        if activation == "LR":
            out = jnp.maximum(out, 0.2 * out)               # LeakyReLU(0.2)
        elif activation == "Sigmoid":
            out = jax.nn.sigmoid(out)                       # EUP
        elif activation is not None:
            raise AssertionError(
                f"STGAN's FC requires LR or Sigmoid, not {activation}")
        return out.astype(o_ref.dtype)

    if num_k == 1:
        # Whole K in one tile: straight matmul + fused bias/activation.
        o_ref[...] = epilogue(
            jnp.dot(x_ref[...], w_ref[...], preferred_element_type=jnp.float32))
    else:
        k = pl.program_id(2)

        @pl.when(k == 0)
        def _():
            o_ref[...] = jnp.zeros_like(o_ref)

        # Accumulate directly into the resident f32 output block (no scratch).
        o_ref[...] += jnp.dot(x_ref[...], w_ref[...],
                              preferred_element_type=jnp.float32)

        @pl.when(k == num_k - 1)
        def _():
            o_ref[...] = epilogue(o_ref[...])


# ----------------------------------------------------------------------------
# Tiling helpers
# ----------------------------------------------------------------------------
def _choose_n_tiles(cout):
    """Np minimizes N padding; tn is the largest 128-multiple <=512 dividing Np."""
    np_ = _round_up(cout, 128)
    tn = 128
    for cand in (512, 384, 256, 128):
        if np_ % cand == 0:
            tn = cand
            break
    return np_, tn


def _choose_k_tiles(cin):
    """Collapse K into a single tile whenever it comfortably fits VMEM."""
    kp = _round_up(cin, 128)
    if kp <= 2048:
        return kp, kp            # K grid axis == 1
    kp = _round_up(cin, 512)
    return kp, 512


def _choose_m_tiles(batch):
    mp = _round_up(batch, 8)
    if mp <= 512:
        return mp, mp            # one M tile, weight streamed exactly once
    mp = _round_up(batch, 256)
    return mp, 256


def _ensure_parallel_grid(mp, tm, np_, tn, batch):
    """Keep the (M,N) parallel grid >= 2 steps so v7x megacore has work."""
    if (mp // tm) * (np_ // tn) >= 2:
        return tm, tn, mp
    if tn >= 256 and (tn // 2) % 128 == 0:
        return tm, tn // 2, mp          # split N: each core streams half of W
    if batch > 8:
        mp = _round_up(batch, 16)
        return mp // 2, tn, mp          # split M
    return tm, tn, mp                   # tiny problem; single core is fine


# ----------------------------------------------------------------------------
# Low-level launch on pre-padded operands
# ----------------------------------------------------------------------------
def _fc_prepared(x_p, w_p, b_p, activation, tm, tn, tk):
    mp, kp = x_p.shape
    _, np_ = w_p.shape
    num_k = kp // tk
    grid = (mp // tm, np_ // tn, num_k)
    use_bias = b_p is not None

    in_specs = [
        pl.BlockSpec((tm, tk), lambda i, j, k: (i, k)),   # x tile
        pl.BlockSpec((tk, tn), lambda i, j, k: (k, j)),   # W^T tile (lane-dense)
    ]
    operands = [x_p, w_p]
    if use_bias:
        in_specs.append(pl.BlockSpec((1, tn), lambda i, j, k: (0, j)))
        operands.append(b_p)

    kernel = functools.partial(_fc_kernel, activation=activation,
                               use_bias=use_bias, num_k=num_k)

    in_itemsize = jnp.dtype(x_p.dtype).itemsize
    cost = pl.CostEstimate(
        flops=2 * mp * np_ * kp,
        transcendentals=(mp * np_ if activation == "Sigmoid" else 0),
        bytes_accessed=(x_p.size + w_p.size) * in_itemsize + mp * np_ * 4,
    )

    # Double-buffered inputs + (up to) double-buffered f32 output block.
    vmem_est = (2 * (tm * tk + tk * tn + (tn if use_bias else 0)) * in_itemsize
                + 2 * tm * tn * 4)
    vmem_limit = None
    if vmem_est > 12 * 1024 * 1024:      # above v5e's scoped default comfort zone
        vmem_limit = min(2 * vmem_est, 40 * 1024 * 1024)

    return pl.pallas_call(
        kernel,
        out_shape=jax.ShapeDtypeStruct((mp, np_), jnp.float32),
        grid_spec=pltpu.PrefetchScalarGridSpec(
            num_scalar_prefetch=0,
            grid=grid,
            in_specs=in_specs,
            out_specs=pl.BlockSpec((tm, tn), lambda i, j, k: (i, j)),
        ),
        compiler_params=pltpu.CompilerParams(
            dimension_semantics=("parallel", "parallel", "arbitrary"),
            vmem_limit_bytes=vmem_limit),
        cost_estimate=cost,
    )(*operands)


# ----------------------------------------------------------------------------
# Functional API (prep done per call -- prefer FCPallas, which caches the prep)
# ----------------------------------------------------------------------------
def fc_forward(x, weight, bias=None, activation="LR", *,
               compute_dtype=jnp.float32, tk=None):
    """Pallas implementation of FC.forward.

    x:      (B, Cin)    ; weight: (Cout, Cin) torch F.linear layout ; bias: (Cout,) or None
    """
    assert activation in ("LR", "Sigmoid", None), \
        f"STGAN's FC requires LR or Sigmoid, not {activation}"
    batch, cin = x.shape
    cout = weight.shape[0]

    np_, tn = _choose_n_tiles(cout)
    if tk is None:
        kp, tk = _choose_k_tiles(cin)
    else:
        assert tk % 128 == 0
        kp = _round_up(cin, tk)
    mp, tm = _choose_m_tiles(batch)
    tm, tn, mp = _ensure_parallel_grid(mp, tm, np_, tn, batch)

    w_p = weight.T.astype(compute_dtype)              # (Cin, Cout)
    if kp != cin or np_ != cout:
        w_p = jnp.pad(w_p, ((0, kp - cin), (0, np_ - cout)))
    x_p = x.astype(compute_dtype)
    if mp != batch or kp != cin:
        x_p = jnp.pad(x_p, ((0, mp - batch), (0, kp - cin)))
    b_p = None
    if bias is not None:
        b_p = bias.reshape(1, cout).astype(jnp.float32)
        if np_ != cout:
            b_p = jnp.pad(b_p, ((0, 0), (0, np_ - cout)))

    out_p = _fc_prepared(x_p, w_p, b_p, activation, tm, tn, tk)
    out = out_p if (mp == batch and np_ == cout) else out_p[:batch, :cout]
    return out.astype(x.dtype)


# ----------------------------------------------------------------------------
# Module mirror with cached (transposed + padded) weight
# ----------------------------------------------------------------------------
class FCPallas:
    """Mirror of the PyTorch FC module with deterministic init."""

    def __init__(self, in_channels, out_channels, use_bias=False,
                 activation="LR", gain=2 ** 0.5, key=None,
                 compute_dtype=jnp.float32):
        if key is None:
            key = jax.random.PRNGKey(0)
        assert activation in ("LR", "Sigmoid", None), \
            f"STGAN's FC requires LR or Sigmoid, not {activation}"
        self.activation = activation
        self.in_channels = in_channels
        self.out_channels = out_channels
        self.compute_dtype = compute_dtype

        # NOTE: replicates the PyTorch module literally:
        #   he_std = in_channels * -0.5 * gain   (likely intended ** -0.5,
        #   but we preserve the original module's numerics).
        self.he_std = in_channels * -0.5 * gain
        self.weight = (jax.random.normal(key, (out_channels, in_channels),
                                         dtype=jnp.float32) * self.he_std)
        self.bias = jnp.zeros((out_channels,), jnp.float32) if use_bias else None

        # One-time prep (hoisted out of the per-call path): transpose to
        # (Cin, Cout), cast to compute dtype, zero-pad to tile-aligned shape.
        self._Np, self._tn = _choose_n_tiles(out_channels)
        self._Kp, self._tk = _choose_k_tiles(in_channels)
        w_t = self.weight.T.astype(compute_dtype)
        self._w_prepared = jnp.pad(
            w_t, ((0, self._Kp - in_channels), (0, self._Np - out_channels)))
        if use_bias:
            b = self.bias.reshape(1, out_channels).astype(jnp.float32)
            self._b_prepared = jnp.pad(
                b, ((0, 0), (0, self._Np - out_channels)))
        else:
            self._b_prepared = None

    def __call__(self, x):
        batch, cin = x.shape
        assert cin == self.in_channels
        mp, tm = _choose_m_tiles(batch)
        tm, tn, mp = _ensure_parallel_grid(mp, tm, self._Np, self._tn, batch)

        x_p = x.astype(self.compute_dtype)
        if mp != batch or self._Kp != cin:
            x_p = jnp.pad(x_p, ((0, mp - batch), (0, self._Kp - cin)))

        out_p = _fc_prepared(x_p, self._w_prepared, self._b_prepared,
                             self.activation, tm, tn, self._tk)
        if mp != batch or self._Np != self.out_channels:
            out_p = out_p[:batch, :self.out_channels]
        return out_p.astype(x.dtype)


# ----------------------------------------------------------------------------
# Reference + tests
# ----------------------------------------------------------------------------
def _reference(x, weight, bias, activation):
    out = x @ weight.T
    if bias is not None:
        out = out + bias
    if activation == "LR":
        out = jnp.where(out > 0, out, 0.2 * out)
    elif activation == "Sigmoid":
        out = jax.nn.sigmoid(out)
    return out


if __name__ == "__main__":
    key = jax.random.PRNGKey(0)
    k_x, k_w, k_w2, k_x3, k_w3 = jax.random.split(key, 5)

    # Small demo shapes (padded to 128 lanes internally).
    B, Cin, Cout = 8, 32, 64
    x = jax.random.normal(k_x, (B, Cin), dtype=jnp.float32)

    # Default config: use_bias=False, activation='LR'.
    fc = FCPallas(Cin, Cout, use_bias=False, activation="LR", key=k_w)
    out = jax.block_until_ready(fc(x))
    ref = _reference(x, fc.weight, fc.bias, fc.activation)
    assert out.shape == (B, Cout)
    assert jnp.allclose(out, ref, atol=1e-4, rtol=1e-4)

    # Bias + Sigmoid path.
    fc2 = FCPallas(Cin, Cout, use_bias=True, activation="Sigmoid", key=k_w2)
    out2 = jax.block_until_ready(fc2(x))
    ref2 = _reference(x, fc2.weight, fc2.bias, fc2.activation)
    assert jnp.allclose(out2, ref2, atol=1e-4, rtol=1e-4)

    # Larger shape: exercises the megacore grid-splitting + N padding path.
    B3, Cin3, Cout3 = 64, 256, 384
    x3 = jax.random.normal(k_x3, (B3, Cin3), dtype=jnp.float32)
    fc3 = FCPallas(Cin3, Cout3, use_bias=True, activation="LR", key=k_w3)
    out3 = jax.block_until_ready(fc3(x3))
    ref3 = _reference(x3, fc3.weight, fc3.bias, fc3.activation)
    assert out3.shape == (B3, Cout3)
    assert jnp.allclose(out3, ref3, atol=1e-3, rtol=1e-3)

    # Functional path with forced K tiling (exercises the pl.when accumulation
    # branch while keeping shapes small).
    out3k = jax.block_until_ready(
        fc_forward(x3, fc3.weight, fc3.bias, "LR", tk=128))
    assert jnp.allclose(out3k, ref3, atol=1e-3, rtol=1e-3)

    # bf16 operand path (f32 MXU accumulation) — check via relative Frobenius
    # error so near-zero elements don't make the check brittle.
    fc_bf16 = FCPallas(Cin3, Cout3, use_bias=True, activation="LR", key=k_w3,
                       compute_dtype=jnp.bfloat16)
    out_bf = jax.block_until_ready(fc_bf16(x3))
    assert out_bf.shape == (B3, Cout3) and out_bf.dtype == x3.dtype
    rel_err = jnp.linalg.norm(out_bf - ref3) / jnp.linalg.norm(ref3)
    assert rel_err < 2e-2

    print("KERNEL_OK")
</pallas_src>

<mosaic_0001>
module attributes {stable_mosaic.version = 11 : i64} {
  func.func @_fc_kernel(%arg0: i32, %arg1: i32, %arg2: i32, %arg3: memref<8x128xf32, #tpu.memory_space<vmem>>, %arg4: memref<128x128xf32, #tpu.memory_space<vmem>>, %arg5: memref<8x128xf32, #tpu.memory_space<vmem>>) attributes {dimension_semantics = [#tpu.dimension_semantics<parallel>, #tpu.dimension_semantics<parallel>, #tpu.dimension_semantics<arbitrary>], iteration_bounds = array<i64: 1, 1, 1>, scalar_prefetch = 0 : i64, scratch_operands = 0 : i64, tpu.core_type = #tpu.core_type<tc>, window_params = [{transform_indices = @transform_0, window_bounds = array<i64: 8, 128>}, {transform_indices = @transform_1, window_bounds = array<i64: 128, 128>}, {transform_indices = @transform_2, window_bounds = array<i64: 8, 128>}]} {
    %c0 = arith.constant 0 : index
    %c0_0 = arith.constant 0 : index
    %0 = vector.load %arg3[%c0, %c0_0] : memref<8x128xf32, #tpu.memory_space<vmem>>, vector<8x128xf32>
    %c0_1 = arith.constant 0 : index
    %c0_2 = arith.constant 0 : index
    %1 = vector.load %arg4[%c0_1, %c0_2] : memref<128x128xf32, #tpu.memory_space<vmem>>, vector<128x128xf32>
    %cst = arith.constant dense<0.000000e+00> : vector<8x128xf32>
    %2 = tpu.matmul %0, %1, %cst {dimension_numbers = #tpu.dot_dimension_numbers<[1], [0], [0], [1], [0, 0, 1, 1], [], []>} : vector<8x128xf32>, vector<128x128xf32>, vector<8x128xf32> -> vector<8x128xf32>
    %cst_3 = arith.constant 2.000000e-01 : f32
    %3 = vector.broadcast %cst_3 : f32 to vector<8x128xf32>
    %4 = arith.mulf %3, %2 : vector<8x128xf32>
    %5 = arith.maximumf %2, %4 : vector<8x128xf32>
    %c0_4 = arith.constant 0 : index
    %c0_5 = arith.constant 0 : index
    %6 = vector.load %arg5[%c0_4, %c0_5] : memref<8x128xf32, #tpu.memory_space<vmem>>, vector<8x128xf32>
    tpu.vector_store %arg5[%c0_4, %c0_5], %5 {strides = array<i32>} : memref<8x128xf32, #tpu.memory_space<vmem>>, vector<8x128xf32>,
    return
  }
  func.func @transform_0(%arg0: i32, %arg1: i32, %arg2: i32) -> (i32, i32) {
    %c0_i32 = arith.constant 0 : i32
    return %arg0, %arg2 : i32, i32
  }
  func.func @transform_1(%arg0: i32, %arg1: i32, %arg2: i32) -> (i32, i32) {
    %c0_i32 = arith.constant 0 : i32
    return %arg2, %arg1 : i32, i32
  }
  func.func @transform_2(%arg0: i32, %arg1: i32, %arg2: i32) -> (i32, i32) {
    %c0_i32 = arith.constant 0 : i32
    return %arg0, %arg1 : i32, i32
  }
}

</mosaic_0001>

<llo_original>
// kernel: tpu_custom_call.1
$region0: #{tpu_custom_call.1}
  #allocation0 [shape = 'u32[]', space=smem, size = 0x4, offset = 0x4, fixed_abs, tag = 'smem constant byte address 0x4 - core index']
  #allocation1 [shape = 'u32[144,128]{1,0:T(1,128)}', space=vmem, size = 0x12000, scoped, tag = 'internal scratch']
  %s0 = inlined_call_operand.hbm [shape: f32[8,128], index: 0, kind: input, shape index: {}]
  %s1 = inlined_call_operand.hbm [shape: f32[128,128], index: 1, kind: input, shape index: {}]
  %s2 = inlined_call_operand.hbm [shape: f32[8,128], index: 2, kind: output, shape index: {}]
  %s3 = sld [smem:[#allocation0]]
  $region26: #{tpu_custom_call.1} parent=0
    _
  %s5 = ssub.s32 1, %s3
  %s6 = scalar_select 0, %s5, %s3
  $region1: #{tpu_custom_call.1} parent=0
    #allocation2 [shape = 'u8[4096]{0}', space=vmem, size = 0x1000, scoped, tag = 'input window, operand 0, single buffered']
    #allocation3 [shape = 's32[1]{0}', space=sflag, size = 0x4, scoped, tag = 'scoped memory for tpu_custom_call.1']
    #allocation4 [shape = 's32[1]{0}', space=sflag, size = 0x4, scoped, tag = 'scoped memory for tpu_custom_call.1']
    #allocation5 [shape = 'u8[65536]{0}', space=vmem, size = 0x10000, scoped, tag = 'input window, operand 1, single buffered']
    #allocation6 [shape = 's32[1]{0}', space=sflag, size = 0x4, scoped, tag = 'scoped memory for tpu_custom_call.1']
    #allocation7 [shape = 'u8[4096]{0}', space=vmem, size = 0x1000, scoped, tag = 'output window, operand 0, single buffered']
    %7 = vsyncpa [#allocation3], 0
    %8 = vsyncpa [#allocation6], 0
    %9 = vsyncpa [#allocation4], 0
    // Predicated region
    $region2: #{tpu_custom_call.1} parent=1 // pred_check
      _
    $region3: #{tpu_custom_call.1} parent=1 // pred_check_branch
      %11 = sbr.rel (0) target = $region5
    $region4: #{tpu_custom_call.1} parent=1 // pred_region
      %s13 = ssub.s32 128, 128
      %14 = vsyncadd [#allocation3], %s13
      %s16 = sshll.u32 [#allocation2], 4
      %s17 = int_to_ptr.vmem [resolvable:$true] %s16
      %19 = dma.hbm_to_vmem [thread:$0]  %s0, 128, %s17, [#allocation3]
    $region5: #{tpu_custom_call.1} parent=1 // pred_fallthru
      _
    // Predicated region
    $region6: #{tpu_custom_call.1} parent=1 // pred_check
      _
    $region7: #{tpu_custom_call.1} parent=1 // pred_check_branch
      %21 = sbr.rel (0) target = $region9
    $region8: #{tpu_custom_call.1} parent=1 // pred_region
      %s23 = ssub.s32 2048, 2048
      %24 = vsyncadd [#allocation6], %s23
      %s25 = sshll.u32 [#allocation5], 4
      %s26 = int_to_ptr.vmem [resolvable:$true] %s25
      %31 = dma.hbm_to_vmem [thread:$0]  %s1, 2048, %s26, [#allocation6], 128, 128, 8
    $region9: #{tpu_custom_call.1} parent=1 // pred_fallthru
      _
    // Predicated region
    $region10: #{tpu_custom_call.1} parent=1 // pred_check
      _
    $region11: #{tpu_custom_call.1} parent=1 // pred_check_branch
      %33 = sbr.rel (0) target = $region13
    $region12: #{tpu_custom_call.1} parent=1 // pred_region
      %34 = dma.done [#allocation3], 128
    $region13: #{tpu_custom_call.1} parent=1 // pred_fallthru
      _
    // Predicated region
    $region14: #{tpu_custom_call.1} parent=1 // pred_check
      _
    $region15: #{tpu_custom_call.1} parent=1 // pred_check_branch
      %36 = sbr.rel (0) target = $region17
    $region16: #{tpu_custom_call.1} parent=1 // pred_region
      %37 = dma.done [#allocation6], 2048
    $region17: #{tpu_custom_call.1} parent=1 // pred_fallthru
      _
    %v38 = vld [vmem:[#allocation2] sm:$0xff]
    %v39 = vld [vmem:[#allocation5] sm:$0xff]
    %v40 = vld [vmem:[#allocation5 + $0x8] sm:$0xff]
    %v41 = vld [vmem:[#allocation5 + $0x10] sm:$0xff]
    %v42 = vld [vmem:[#allocation5 + $0x18] sm:$0xff]
    %v43 = vld [vmem:[#allocation5 + $0x20] sm:$0xff]
    %v44 = vld [vmem:[#allocation5 + $0x28] sm:$0xff]
    %v45 = vld [vmem:[#allocation5 + $0x30] sm:$0xff]
    %v46 = vld [vmem:[#allocation5 + $0x38] sm:$0xff]
    %v47 = vld [vmem:[#allocation5 + $0x40] sm:$0xff]
    %v48 = vld [vmem:[#allocation5 + $0x48] sm:$0xff]
    %v49 = vld [vmem:[#allocation5 + $0x50] sm:$0xff]
    %v50 = vld [vmem:[#allocation5 + $0x58] sm:$0xff]
    %v51 = vld [vmem:[#allocation5 + $0x60] sm:$0xff]
    %v52 = vld [vmem:[#allocation5 + $0x68] sm:$0xff]
    %v53 = vld [vmem:[#allocation5 + $0x70] sm:$0xff]
    %v54 = vld [vmem:[#allocation5 + $0x78] sm:$0xff]
    %55 = vmatprep.subr.mxu0 0.0
    %56 = vmatpush1.msra.mxu0 %v39
    %57 = vmatprep.subr.mxu0 0.0
    %58 = vmatpush1.msra.mxu0 %v40
    %59 = vmatprep.subr.mxu0 0.0
    %60 = vmatpush1.msra.mxu0 %v41
    %61 = vmatprep.subr.mxu0 0.0
    %62 = vmatpush1.msra.mxu0 %v42
    %63 = vmatprep.subr.mxu0 0.0
    %64 = vmatpush1.msra.mxu0 %v43
    %65 = vmatprep.subr.mxu0 0.0
    %66 = vmatpush1.msra.mxu0 %v44
    %67 = vmatprep.subr.mxu0 0.0
    %68 = vmatpush1.msra.mxu0 %v45
    %69 = vmatprep.subr.mxu0 0.0
    %70 = vmatpush1.msra.mxu0 %v46
    %71 = vmatprep.subr.mxu0 0.0
    %72 = vmatpush1.msra.mxu0 %v47
    %73 = vmatprep.subr.mxu0 0.0
    %74 = vmatpush1.msra.mxu0 %v48
    %75 = vmatprep.subr.mxu0 0.0
    %76 = vmatpush1.msra.mxu0 %v49
    %77 = vmatprep.subr.mxu0 0.0
    %78 = vmatpush1.msra.mxu0 %v50
    %79 = vmatprep.subr.mxu0 0.0
    %80 = vmatpush1.msra.mxu0 %v51
    %81 = vmatprep.subr.mxu0 0.0
    %82 = vmatpush1.msra.mxu0 %v52
    %83 = vmatprep.subr.mxu0 0.0
    %84 = vmatpush1.msra.mxu0 %v53
    %85 = vmatprep.subr.mxu0 0.0
    %86 = vmatpush1.msra.mxu0 %v54
    %87 = vmatprep.subr.mxu0 0.0
    %88 = vmatpush1.msra.mxu0 0.0
    %89 = vmatprep.subr.mxu0 0.0
    %90 = vmatpush1.msra.mxu0 0.0
    %91 = vmatprep.subr.mxu0 0.0
    %92 = vmatpush1.msra.mxu0 0.0
    %93 = vmatprep.subr.mxu0 0.0
    %94 = vmatpush1.msra.mxu0 0.0
    %95 = vmatprep.subr.mxu0 0.0
    %96 = vmatpush1.msra.mxu0 0.0
    %97 = vmatprep.subr.mxu0 0.0
    %98 = vmatpush1.msra.mxu0 0.0
    %99 = vmatprep.subr.mxu0 0.0
    %100 = vmatpush1.msra.mxu0 0.0
    %101 = vmatprep.subr.mxu0 0.0
    %102 = vmatpush1.msra.mxu0 0.0
    %103 = vmatprep.subr.mxu0 0.0
    %104 = vmatpush1.msra.mxu0 0.0
    %105 = vmatprep.subr.mxu0 0.0
    %106 = vmatpush1.msra.mxu0 0.0
    %107 = vmatprep.subr.mxu0 0.0
    %108 = vmatpush1.msra.mxu0 0.0
    %109 = vmatprep.subr.mxu0 0.0
    %110 = vmatpush1.msra.mxu0 0.0
    %111 = vmatprep.subr.mxu0 0.0
    %112 = vmatpush1.msra.mxu0 0.0
    %113 = vmatprep.subr.mxu0 0.0
    %114 = vmatpush1.msra.mxu0 0.0
    %115 = vmatprep.subr.mxu0 0.0
    %116 = vmatpush1.msra.mxu0 0.0
    %117 = vmatprep.subr.mxu0 0.0
    %118 = vmatpush1.msra.mxu0 0.0
    %119 = vmatprep.mubr.f32.mxu0 0.0
    %120 = vmatmul.mubr.f32.gmra.mrb[0].mxu0 %v38
    %v121 = vpop.f32.mrb[0].mxu0
    %v122 = vadd.f32 0.0, %v121
    %v123 = vpop.f32.mrb[0].mxu0
    %124 = vdwg.mxu0
    %v125 = vmul.f32 %v122, 0.2
    %v126 = vmax.f32 %v122, %v125
    %127 = vst [vmem:[#allocation7] sm:$0xff] %v126
    // Predicated region
    $region18: #{tpu_custom_call.1} parent=1 // pred_check
      _
    $region19: #{tpu_custom_call.1} parent=1 // pred_check_branch
      %129 = sbr.rel (0) target = $region21
    $region20: #{tpu_custom_call.1} parent=1 // pred_region
      %s131 = ssub.s32 128, 128
      %132 = vsyncadd [#allocation4], %s131
      %s134 = sshll.u32 [#allocation7], 4
      %s135 = int_to_ptr.vmem [resolvable:$true] %s134
      %137 = dma.vmem_to_hbm [thread:$0]  %s135, 128, %s2, [#allocation4]
    $region21: #{tpu_custom_call.1} parent=1 // pred_fallthru
      _
    // Predicated region
    $region22: #{tpu_custom_call.1} parent=1 // pred_check
      _
    $region23: #{tpu_custom_call.1} parent=1 // pred_check_branch
      %139 = sbr.rel (0) target = $region25
    $region24: #{tpu_custom_call.1} parent=1 // pred_region
      %140 = dma.done [#allocation4], 128
    $region25: #{tpu_custom_call.1} parent=1 // pred_fallthru
      _
    %141 = vsyncpa [#allocation3], 1
    %142 = vsyncpa [#allocation6], 1
    %143 = vsyncpa [#allocation4], 1

</llo_original>
